<compile_context>
chip_gen: v7x
topology: tpu7x:2x2x1
jax: 0.10.0
libtpu: 0.0.40
codegen_flags: <defaults>
</compile_context>

<pallas_src>
import functools
import math

import jax
import jax.numpy as jnp
from jax.experimental import pallas as pl
from jax.experimental.pallas import tpu as pltpu


def _attn_kernel(x_ref, w_ref, o_ref, *, scale, d_pad):
    """x_ref: (Bb, T, d_in); w_ref: (d_in, 3*d_pad) bf16; o_ref: (Bb, T, d_pad)."""
    Bb, T, d_in = x_ref.shape

    x = x_ref[...].astype(jnp.bfloat16)                # (Bb, T, d_in)
    w = w_ref[...]                                     # (d_in, 3*d_pad) bf16

    # Fused QKV projection: one MXU pass, lane-dense N = 3*d_pad.
    wb = jnp.broadcast_to(w, (Bb, d_in, 3 * d_pad))
    qkv = jnp.einsum("btd,bdf->btf", x, wb,
                     preferred_element_type=jnp.float32)   # (Bb, T, 3*d_pad) f32

    # Static, lane-aligned slices (0:128, 128:256, 256:384).
    q = qkv[:, :, 0:d_pad] * scale                     # fold 1/sqrt(d_in) into Q
    k = qkv[:, :, d_pad:2 * d_pad]
    v = qkv[:, :, 2 * d_pad:3 * d_pad]

    # scores = Q K^T: contract the last axes of both operands directly
    # (no explicit transposed copy of K). Padded columns are zero -> no effect.
    scores = jax.lax.dot_general(
        q.astype(jnp.bfloat16), k.astype(jnp.bfloat16),
        dimension_numbers=(((2,), (2,)), ((0,), (0,))),
        preferred_element_type=jnp.float32)            # (Bb, T, T)

    # Causal mask: torch.triu(ones, diagonal=1) masks entries with col > row.
    row = jax.lax.broadcasted_iota(jnp.int32, (Bb, T, T), 1)
    col = jax.lax.broadcasted_iota(jnp.int32, (Bb, T, T), 2)
    scores = jnp.where(col > row, -jnp.inf, scores)

    # Numerically stable softmax in f32; reciprocal on the EUP slot.
    m = jnp.max(scores, axis=-1, keepdims=True)
    e = jnp.exp(scores - m)
    denom = jnp.sum(e, axis=-1, keepdims=True)
    p = e * pl.reciprocal(denom, approx=True)          # (Bb, T, T)

    # TODO(synk): Dropout(p=0.5) on attention weights skipped (eval-mode identity).

    out = jax.lax.dot_general(
        p.astype(jnp.bfloat16), v.astype(jnp.bfloat16),
        dimension_numbers=(((2,), (1,)), ((0,), (0,))),
        preferred_element_type=jnp.float32)            # (Bb, T, d_pad)

    o_ref[...] = out.astype(o_ref.dtype)               # lane-dense (d_pad=128k) store


def _pick_block_b(B, max_block=8):
    """Largest divisor of B (<= max_block) that still leaves >= 2 grid steps
    (so v7x's two TensorCores both get work); 1 batch/step for tiny B."""
    if B <= 1:
        return 1
    best = 1
    for cand in range(1, min(B, max_block) + 1):
        if B % cand == 0 and (B // cand) >= 2:
            best = cand
    return best


def self_attention_v1(x, wq, wk, wv, *, block_b=None):
    """x: (B, T, d_in); wq/wk/wv: (d_in, d_out) (pre-transposed nn.Linear weights)."""
    B, T, d_in = x.shape
    d_out = wq.shape[1]
    d_pad = ((d_out + 127) // 128) * 128               # lane-dense slab width
    d_pad = max(d_pad, 128)

    # Pack the three projections into one lane-padded bf16 weight (d_in, 3*d_pad).
    w_qkv = jnp.zeros((d_in, 3 * d_pad), jnp.float32)
    w_qkv = w_qkv.at[:, 0:d_out].set(wq)
    w_qkv = w_qkv.at[:, d_pad:d_pad + d_out].set(wk)
    w_qkv = w_qkv.at[:, 2 * d_pad:2 * d_pad + d_out].set(wv)
    w_qkv = w_qkv.astype(jnp.bfloat16)

    if block_b is None:
        block_b = _pick_block_b(B)
    assert B % block_b == 0, "block_b must divide B"

    scale = 1.0 / math.sqrt(float(d_in))               # module scales by d_in**0.5

    kernel = functools.partial(_attn_kernel, scale=scale, d_pad=d_pad)

    out_padded = pl.pallas_call(
        kernel,
        out_shape=jax.ShapeDtypeStruct((B, T, d_pad), x.dtype),
        grid_spec=pltpu.PrefetchScalarGridSpec(
            num_scalar_prefetch=0,
            grid=(B // block_b,),
            in_specs=[
                pl.BlockSpec((block_b, T, d_in), lambda b: (b, 0, 0)),
                pl.BlockSpec((d_in, 3 * d_pad), lambda b: (0, 0)),
            ],
            out_specs=pl.BlockSpec((block_b, T, d_pad), lambda b: (b, 0, 0)),
        ),
        compiler_params=pltpu.CompilerParams(
            dimension_semantics=("parallel",)),
    )(x, w_qkv)

    return out_padded[..., :d_out]


def _reference(x, wq, wk, wv):
    """Pure-JAX f32 reference matching the PyTorch module (eval mode)."""
    d_in = x.shape[-1]
    q = x @ wq
    k = x @ wk
    v = x @ wv
    scores = jnp.einsum("btd,bsd->bts", q, k)
    T = x.shape[1]
    mask = jnp.triu(jnp.ones((T, T), dtype=bool), k=1)
    scores = jnp.where(mask[None], -jnp.inf, scores)
    w = jax.nn.softmax(scores / math.sqrt(d_in), axis=-1)
    return jnp.einsum("bts,bsd->btd", w, v)


if __name__ == "__main__":
    # Small shapes consistent with the module: batch=2, seq=context_length=8,
    # d_in=32, d_out=16.
    B, T, d_in, d_out = 2, 8, 32, 16

    key = jax.random.PRNGKey(0)
    kx, kq, kk, kv = jax.random.split(key, 4)

    x = jax.random.normal(kx, (B, T, d_in), dtype=jnp.float32)
    # Deterministic "nn.Linear"-style init (uniform +-1/sqrt(d_in)), stored
    # pre-transposed as (d_in, d_out).
    lim = 1.0 / math.sqrt(d_in)
    wq = jax.random.uniform(kq, (d_in, d_out), jnp.float32, -lim, lim)
    wk = jax.random.uniform(kk, (d_in, d_out), jnp.float32, -lim, lim)
    wv = jax.random.uniform(kv, (d_in, d_out), jnp.float32, -lim, lim)

    out = self_attention_v1(x, wq, wk, wv)
    out = jax.block_until_ready(out)

    ref = _reference(x, wq, wk, wv)
    assert out.shape == (B, T, d_out)
    # Loose-ish tolerance: kernel uses bf16 MXU operands (f32 accumulate) and
    # the approximate EUP reciprocal; reference is full f32.
    assert jnp.allclose(out, ref, atol=5e-2, rtol=5e-2), "mismatch vs reference"

    print("KERNEL_OK")
</pallas_src>

<mosaic_0001>
module attributes {stable_mosaic.version = 11 : i64} {
  func.func @_attn_kernel(%arg0: i32, %arg1: memref<1x8x32xf32, #tpu.memory_space<vmem>>, %arg2: memref<32x384xbf16, #tpu.memory_space<vmem>>, %arg3: memref<1x8x128xf32, #tpu.memory_space<vmem>>) attributes {dimension_semantics = [#tpu.dimension_semantics<parallel>], iteration_bounds = array<i64: 2>, scalar_prefetch = 0 : i64, scratch_operands = 0 : i64, tpu.core_type = #tpu.core_type<tc>, window_params = [{transform_indices = @transform_0, window_bounds = array<i64: 1, 8, 32>}, {pipeline_mode = #tpu.pipeline_mode<synchronous>, transform_indices = @transform_1, window_bounds = array<i64: 32, 384>}, {transform_indices = @transform_2, window_bounds = array<i64: 1, 8, 128>}]} {
    %c0 = arith.constant 0 : index
    %c0_0 = arith.constant 0 : index
    %c0_1 = arith.constant 0 : index
    %0 = vector.load %arg1[%c0, %c0_0, %c0_1] : memref<1x8x32xf32, #tpu.memory_space<vmem>>, vector<1x8x32xf32>
    %1 = arith.truncf %0 : vector<1x8x32xf32> to vector<1x8x32xbf16>
    %c0_2 = arith.constant 0 : index
    %c0_3 = arith.constant 0 : index
    %2 = vector.load %arg2[%c0_2, %c0_3] : memref<32x384xbf16, #tpu.memory_space<vmem>>, vector<32x384xbf16>
    %3 = vector.shape_cast %2 : vector<32x384xbf16> to vector<1x32x384xbf16>
    "tpu.trace_start"() <{level = 10 : i32, message = "btd,bdf->btf"}> : () -> ()
    %cst = arith.constant dense<0.000000e+00> : vector<1x8x384xf32>
    %4 = tpu.matmul %1, %3, %cst {dimension_numbers = #tpu.dot_dimension_numbers<[2], [1], [1], [2], [0, 0, 0, 1, 1, 2], [0], [0]>} : vector<1x8x32xbf16>, vector<1x32x384xbf16>, vector<1x8x384xf32> -> vector<1x8x384xf32>
    "tpu.trace_stop"() : () -> ()
    %5 = vector.extract_strided_slice %4 {offsets = [0, 0, 0], sizes = [1, 8, 128], strides = [1, 1, 1]} : vector<1x8x384xf32> to vector<1x8x128xf32>
    %cst_4 = arith.constant 0.176776692 : f32
    %6 = vector.broadcast %cst_4 : f32 to vector<1x8x128xf32>
    %7 = arith.mulf %5, %6 : vector<1x8x128xf32>
    %8 = vector.extract_strided_slice %4 {offsets = [0, 0, 128], sizes = [1, 8, 128], strides = [1, 1, 1]} : vector<1x8x384xf32> to vector<1x8x128xf32>
    %9 = vector.extract_strided_slice %4 {offsets = [0, 0, 256], sizes = [1, 8, 128], strides = [1, 1, 1]} : vector<1x8x384xf32> to vector<1x8x128xf32>
    %10 = arith.truncf %7 : vector<1x8x128xf32> to vector<1x8x128xbf16>
    %11 = arith.truncf %8 : vector<1x8x128xf32> to vector<1x8x128xbf16>
    %cst_5 = arith.constant dense<0.000000e+00> : vector<1x8x8xf32>
    %12 = tpu.matmul %10, %11, %cst_5 {dimension_numbers = #tpu.dot_dimension_numbers<[2], [2], [1], [1], [0, 0, 0, 1, 1, 1], [0], [0]>} : vector<1x8x128xbf16>, vector<1x8x128xbf16>, vector<1x8x8xf32> -> vector<1x8x8xf32>
    %13 = tpu.iota {dimensions = array<i32: 1>} : vector<1x8x8xi32>
    %14 = tpu.iota {dimensions = array<i32: 2>} : vector<1x8x8xi32>
    %15 = arith.cmpi sgt, %14, %13 : vector<1x8x8xi32>
    %cst_6 = arith.constant 0xFF800000 : f32
    %16 = vector.broadcast %cst_6 : f32 to vector<1x8x8xf32>
    %17 = arith.select %15, %16, %12 : vector<1x8x8xi1>, vector<1x8x8xf32>
    %cst_7 = arith.constant dense<0xFF800000> : vector<1x8xf32>
    %18 = vector.multi_reduction <maximumf>, %17, %cst_7 [2] : vector<1x8x8xf32> to vector<1x8xf32>
    %19 = vector.shape_cast %18 : vector<1x8xf32> to vector<1x8x1xf32>
    %20 = vector.broadcast %19 : vector<1x8x1xf32> to vector<1x8x8xf32>
    %21 = arith.subf %17, %20 : vector<1x8x8xf32>
    %22 = math.exp %21 : vector<1x8x8xf32>
    %cst_8 = arith.constant dense<0.000000e+00> : vector<1x8xf32>
    %23 = vector.multi_reduction <add>, %22, %cst_8 [2] : vector<1x8x8xf32> to vector<1x8xf32>
    %24 = vector.shape_cast %23 : vector<1x8xf32> to vector<1x8x1xf32>
    %25 = tpu.reciprocal %24 {approx = true} : vector<1x8x1xf32> -> vector<1x8x1xf32>
    %26 = vector.broadcast %25 : vector<1x8x1xf32> to vector<1x8x8xf32>
    %27 = arith.mulf %22, %26 : vector<1x8x8xf32>
    %28 = arith.truncf %27 : vector<1x8x8xf32> to vector<1x8x8xbf16>
    %29 = arith.truncf %9 : vector<1x8x128xf32> to vector<1x8x128xbf16>
    %cst_9 = arith.constant dense<0.000000e+00> : vector<1x8x128xf32>
    %30 = tpu.matmul %28, %29, %cst_9 {dimension_numbers = #tpu.dot_dimension_numbers<[2], [1], [1], [2], [0, 0, 0, 1, 1, 2], [0], [0]>} : vector<1x8x8xbf16>, vector<1x8x128xbf16>, vector<1x8x128xf32> -> vector<1x8x128xf32>
    %c0_10 = arith.constant 0 : index
    %c0_11 = arith.constant 0 : index
    %c0_12 = arith.constant 0 : index
    %31 = vector.load %arg3[%c0_10, %c0_11, %c0_12] : memref<1x8x128xf32, #tpu.memory_space<vmem>>, vector<1x8x128xf32>
    tpu.vector_store %arg3[%c0_10, %c0_11, %c0_12], %30 {strides = array<i32>} : memref<1x8x128xf32, #tpu.memory_space<vmem>>, vector<1x8x128xf32>,
    return
  }
  func.func @transform_0(%arg0: i32) -> (i32, i32, i32) {
    %c0_i32 = arith.constant 0 : i32
    %c0_i32_0 = arith.constant 0 : i32
    %c0_i32_1 = arith.constant 0 : i32
    return %arg0, %c0_i32, %c0_i32_0 : i32, i32, i32
  }
  func.func @transform_1(%arg0: i32) -> (i32, i32) {
    %c0_i32 = arith.constant 0 : i32
    %c0_i32_0 = arith.constant 0 : i32
    %c0_i32_1 = arith.constant 0 : i32
    return %c0_i32, %c0_i32_0 : i32, i32
  }
  func.func @transform_2(%arg0: i32) -> (i32, i32, i32) {
    %c0_i32 = arith.constant 0 : i32
    %c0_i32_0 = arith.constant 0 : i32
    %c0_i32_1 = arith.constant 0 : i32
    return %arg0, %c0_i32, %c0_i32_0 : i32, i32, i32
  }
}

</mosaic_0001>

<llo_original>
// kernel: tpu_custom_call.1
$region0: #{tpu_custom_call.1}
  #allocation0 [shape = 'u32[]', space=smem, size = 0x4, offset = 0x4, fixed_abs, tag = 'smem constant byte address 0x4 - core index']
  #allocation1 [shape = 'u32[144,128]{1,0:T(1,128)}', space=vmem, size = 0x12000, scoped, tag = 'internal scratch']
  %s0 = inlined_call_operand.hbm [shape: f32[2,8,32], index: 0, kind: input, shape index: {}]
  %s1 = inlined_call_operand.hbm [shape: bf16[32,384], index: 1, kind: input, shape index: {}]
  %s2 = inlined_call_operand.hbm [shape: f32[2,8,128], index: 2, kind: output, shape index: {}]
  %s3 = sld [smem:[#allocation0]]
  $region49: #{tpu_custom_call.1} parent=0
    _
  %s5 = ssub.s32 1, %s3
  %s6 = scalar_select 0, %s5, %s3
  $region1: #{tpu_custom_call.1} parent=0
    #allocation2 [shape = 'u8[8192]{0}', space=vmem, size = 0x2000, scoped, tag = 'input window, operand 0']
    #allocation3 [shape = 's32[2]{0}', space=sflag, size = 0x8, scoped, tag = 'scoped memory for tpu_custom_call.1']
    #allocation4 [shape = 's32[2]{0}', space=sflag, size = 0x8, scoped, tag = 'scoped memory for tpu_custom_call.1']
    #allocation5 [shape = 'u8[24576]{0}', space=vmem, size = 0x6000, scoped, tag = 'input window, operand 1, single buffered']
    #allocation6 [shape = 's32[1]{0}', space=sflag, size = 0x4, scoped, tag = 'scoped memory for tpu_custom_call.1']
    #allocation7 [shape = 'u8[8192]{0}', space=vmem, size = 0x2000, scoped, tag = 'output window, operand 0']
    %7 = vsyncpa [#allocation3], 0
    %s8 = scalar_lea.sflag [#allocation3], 1
    %9 = vsyncpa %s8, 0
    %10 = vsyncpa [#allocation6], 0
    %11 = vsyncpa [#allocation4], 0
    %s12 = scalar_lea.sflag [#allocation4], 1
    %13 = vsyncpa %s12, 0
    loop: start=0, step=1, limit=4
    $region2: #{tpu_custom_call.1} parent=1 // loop_pre_header
      _
    $region3: #{tpu_custom_call.1} parent=1 // loop_header
      %s15 = sphi 0, %s19
      %p16 = scmp.ge.s32.totalorder %s15, 4
      %s25 = sphi 0, %s27
      %s28 = sphi 0, %s25
      %s29 = sphi 0, %s28
      %s45 = sphi 0, %s29
      %s49 = sphi 0, %s49
      %s51 = sphi 0, %s49
      %s52 = sphi 0, %s51
      %s66 = sphi 0, %s52
      %s72 = sphi 0, %s74
      %s75 = sphi 0, %s72
      %s76 = sphi 0, %s75
      %s92 = sphi 0, %s76
    $region4: #{tpu_custom_call.1} parent=1 // loop_header_branch
      %18 = sbr.rel (%p16) target = $region8
    $region5: #{tpu_custom_call.1} parent=1 // loop_body
      %s20 = ssub.s32 %s15, 1
      %s21 = ssub.s32 %s15, 2
      %s22 = sadd.s32 %s15, 1
      %s23 = ssub.s32 %s15, %s22
      %p24 = scmp.eq.s32.totalorder %s23, 0
      %s26 = sadd.s32 %s25, 1
      %s27 = scalar_select %p24, %s25, %s26
      %p30 = pneg %p24
      %p31 = scmp.eq.s32.totalorder %s15, 1
      %p32 = por %p30, %p31
      %p33 = scmp.ne.s32.totalorder %s25, %s28
      %p34 = scmp.eq.s32.totalorder %s15, 0
      %p35 = por %p33, %p34
      %p36 = scmp.ne.s32.totalorder %s25, %s28
      %p37 = scmp.eq.s32.totalorder %s20, 1
      %p38 = por %p36, %p37
      %p39 = scmp.ne.s32.totalorder %s28, %s29
      %p40 = scmp.eq.s32.totalorder %s20, 0
      %p41 = por %p39, %p40
      %p42 = scmp.ne.s32.totalorder %s28, %s29
      %p43 = scmp.eq.s32.totalorder %s21, 1
      %p44 = por %p42, %p43
      %p46 = scmp.ne.s32.totalorder %s29, %s45
      %p47 = scmp.eq.s32.totalorder %s21, 0
      %p48 = por %p46, %p47
      %s50 = sadd.s32 %s49, 1
      %p53 = scmp.eq.s32.totalorder %s15, 1
      %p54 = scmp.ne.s32.totalorder %s49, %s51
      %p55 = scmp.eq.s32.totalorder %s15, 0
      %p56 = por %p54, %p55
      %p57 = scmp.ne.s32.totalorder %s49, %s51
      %p58 = scmp.eq.s32.totalorder %s20, 1
      %p59 = por %p57, %p58
      %p60 = scmp.ne.s32.totalorder %s51, %s52
      %p61 = scmp.eq.s32.totalorder %s20, 0
      %p62 = por %p60, %p61
      %p63 = scmp.ne.s32.totalorder %s51, %s52
      %p64 = scmp.eq.s32.totalorder %s21, 1
      %p65 = por %p63, %p64
      %p67 = scmp.ne.s32.totalorder %s52, %s66
      %p68 = scmp.eq.s32.totalorder %s21, 0
      %p69 = por %p67, %p68
      %s70 = ssub.s32 %s15, %s22
      %p71 = scmp.eq.s32.totalorder %s70, 0
      %s73 = sadd.s32 %s72, 1
      %s74 = scalar_select %p71, %s72, %s73
      %p77 = pneg %p71
      %p78 = scmp.eq.s32.totalorder %s15, 1
      %p79 = por %p77, %p78
      %p80 = scmp.ne.s32.totalorder %s72, %s75
      %p81 = scmp.eq.s32.totalorder %s15, 0
      %p82 = por %p80, %p81
      %p83 = scmp.ne.s32.totalorder %s72, %s75
      %p84 = scmp.eq.s32.totalorder %s20, 1
      %p85 = por %p83, %p84
      %p86 = scmp.ne.s32.totalorder %s75, %s76
      %p87 = scmp.eq.s32.totalorder %s20, 0
      %p88 = por %p86, %p87
      %p89 = scmp.ne.s32.totalorder %s75, %s76
      %p90 = scmp.eq.s32.totalorder %s21, 1
      %p91 = por %p89, %p90
      %p93 = scmp.ne.s32.totalorder %s76, %s92
      %p94 = scmp.eq.s32.totalorder %s21, 0
      %p95 = por %p93, %p94
      %p96 = scmp.le.s32.totalorder 1, %s15
      %p97 = scmp.lt.s32.totalorder %s15, 3
      %p98 = pnand %p96, %p97
      %p99 = pneg %p98
      // Predicated region
      $region9: #{tpu_custom_call.1} parent=5 // pred_check
        _
      $region10: #{tpu_custom_call.1} parent=5 // pred_check_branch
        %101 = sbr.rel (%p98) target = $region12
      $region11: #{tpu_custom_call.1} parent=5 // pred_region
        %s102 = ssub.s32 %s15, 1
        // Predicated region
        $region13: #{tpu_custom_call.1} parent=11 // pred_check
          %p103 = pneg %p62
        $region14: #{tpu_custom_call.1} parent=11 // pred_check_branch
          %105 = sbr.rel (%p103) target = $region16
        $region15: #{tpu_custom_call.1} parent=11 // pred_region
          %s107 = ssub.s32 768, 768
          %108 = vsyncadd [#allocation6], %s107
          %s109 = sshll.u32 [#allocation5], 4
          %s110 = int_to_ptr.vmem [resolvable:$true] %s109
          %115 = dma.hbm_to_vmem [thread:$0]  %s1, 768, %s110, [#allocation6], 192, 192, 12
        $region16: #{tpu_custom_call.1} parent=11 // pred_fallthru
          _
      $region12: #{tpu_custom_call.1} parent=5 // pred_fallthru
        _
      %p116 = scmp.lt.s32.totalorder %s15, 2
      // Predicated region
      $region17: #{tpu_custom_call.1} parent=5 // pred_check
        %p117 = pneg %p116
      $region18: #{tpu_custom_call.1} parent=5 // pred_check_branch
        %119 = sbr.rel (%p117) target = $region20
      $region19: #{tpu_custom_call.1} parent=5 // pred_region
        // Predicated region
        $region21: #{tpu_custom_call.1} parent=19 // pred_check
          %p120 = pneg %p35
        $region22: #{tpu_custom_call.1} parent=19 // pred_check_branch
          %122 = sbr.rel (%p120) target = $region24
        $region23: #{tpu_custom_call.1} parent=19 // pred_region
          %s123 = sand.u32 %s25, 1
          %s124 = scalar_lea.sflag [#allocation3], %s123
          %s125 = sand.u32 %s25, 1
          %s126 = smul.addr %s125, 8
          %s127 = scalar_lea.vmem [#allocation2], %s126
          %s129 = ssub.s32 128, 128
          %130 = vsyncadd %s124, %s129
          %s131 = smul.addr %s15, 128
          %s132 = scalar_lea.hbm %s0, %s131
          %s134 = sshll.u32 %s127, 4
          %s135 = int_to_ptr.vmem [resolvable:$true] %s134
          %137 = dma.hbm_to_vmem [thread:$0]  %s132, 128, %s135, %s124
        $region24: #{tpu_custom_call.1} parent=19 // pred_fallthru
          _
      $region20: #{tpu_custom_call.1} parent=5 // pred_fallthru
        _
      %p138 = scmp.le.s32.totalorder 1, %s15
      %p139 = scmp.lt.s32.totalorder %s15, 3
      %p140 = pnand %p138, %p139
      %p141 = pneg %p140
      // Predicated region
      $region25: #{tpu_custom_call.1} parent=5 // pred_check
        _
      $region26: #{tpu_custom_call.1} parent=5 // pred_check_branch
        %143 = sbr.rel (%p140) target = $region28
      $region27: #{tpu_custom_call.1} parent=5 // pred_region
        %s144 = ssub.s32 %s15, 1
        %s145 = sand.u32 %s28, 1
        %s146 = scalar_lea.sflag [#allocation3], %s145
        %s147 = sand.u32 %s28, 1
        %s148 = smul.addr %s147, 8
        %s149 = scalar_lea.vmem [#allocation2], %s148
        // Predicated region
        $region29: #{tpu_custom_call.1} parent=27 // pred_check
          %p150 = pneg %p41
        $region30: #{tpu_custom_call.1} parent=27 // pred_check_branch
          %152 = sbr.rel (%p150) target = $region32
        $region31: #{tpu_custom_call.1} parent=27 // pred_region
          %153 = dma.done %s146, 128
        $region32: #{tpu_custom_call.1} parent=27 // pred_fallthru
          _
        // Predicated region
        $region33: #{tpu_custom_call.1} parent=27 // pred_check
          %p154 = pneg %p62
        $region34: #{tpu_custom_call.1} parent=27 // pred_check_branch
          %156 = sbr.rel (%p154) target = $region36
        $region35: #{tpu_custom_call.1} parent=27 // pred_region
          %157 = dma.done [#allocation6], 768
        $region36: #{tpu_custom_call.1} parent=27 // pred_fallthru
          _
        %s158 = sand.u32 %s28, 1
        %s159 = scalar_lea.sflag [#allocation3], %s158
        %s160 = sand.u32 %s28, 1
        %s161 = smul.addr %s160, 8
        %s162 = scalar_lea.vmem [#allocation2], %s161
        %p163 = pneg %p41
        %p164 = pneg %p38
        %p165 = pneg %p62
        %p166 = pneg %p59
        %p167 = pneg %p88
        %p168 = pneg %p85
        %s169 = sand.u32 %s75, 1
        %s170 = scalar_lea.sflag [#allocation4], %s169
        %s171 = sand.u32 %s75, 1
        %s172 = smul.addr %s171, 8
        %s173 = scalar_lea.vmem [#allocation7], %s172
        %v175 = vld [vmem:[%s149] sm:$0xff]
        %v176 = vpack.c.bf16 %v175, %v175
        %v177 = vld [vmem:[#allocation5] sm:$0xff]
        %v178 = vld [vmem:[#allocation5 + $0x8] sm:$0xf]
        %v179 = vld [vmem:[#allocation5 + $0xc] sm:$0xff]
        %v180 = vld [vmem:[#allocation5 + $0x14] sm:$0xf]
        %v181 = vld [vmem:[#allocation5 + $0x18] sm:$0xff]
        %v182 = vld [vmem:[#allocation5 + $0x20] sm:$0xf]
        %v183 = vld [vmem:[#allocation5 + $0x24] sm:$0xff]
        %v184 = vld [vmem:[#allocation5 + $0x2c] sm:$0xf]
        %v193 = vunpack.c.l.b16 %v177
        %v194 = vunpack.c.h.b16 %v177
        %v195 = vunpack.c.l.b16 %v178
        %v196 = vunpack.c.l.b16 %v179
        %v197 = vunpack.c.h.b16 %v179
        %v198 = vunpack.c.l.b16 %v180
        %v199 = vunpack.c.l.b16 %v181
        %v200 = vunpack.c.h.b16 %v181
        %v201 = vunpack.c.l.b16 %v182
        %v202 = vunpack.c.l.b16 %v183
        %v203 = vunpack.c.h.b16 %v183
        %v204 = vunpack.c.l.b16 %v184
        %v205 = vpack.c.b16 %v196, %v193
        %v206 = vpack.c.b16 %v197, %v194
        %v207 = vpack.c.b16 %v198, %v195
        %v208 = vpack.c.b16 %v202, %v199
        %v209 = vpack.c.b16 %v203, %v200
        %v210 = vpack.c.b16 %v204, %v201
        %vm217 = vcmask 261120
        %v219 = vsel %vm217, %v176, 0
        %221 = vmatprep.subr.bf16.mxu0 %v206
        %222 = vmatpush1.bf16.msra.mxu0 %v205
        %223 = vmatprep.subr.bf16.mxu0 %v209
        %224 = vmatpush1.bf16.msra.mxu0 %v208
        %225 = vmatprep.subr.bf16.mxu0 0
        %226 = vmatpush1.bf16.msra.mxu0 0
        %227 = vmatprep.subr.bf16.mxu0 0
        %228 = vmatpush1.bf16.msra.mxu0 0
        %229 = vmatprep.subr.bf16.mxu0 0
        %230 = vmatpush1.bf16.msra.mxu0 0
        %231 = vmatprep.subr.bf16.mxu0 0
        %232 = vmatpush1.bf16.msra.mxu0 0
        %233 = vmatprep.subr.bf16.mxu0 0
        %234 = vmatpush1.bf16.msra.mxu0 0
        %235 = vmatprep.subr.bf16.mxu0 0
        %236 = vmatpush1.bf16.msra.mxu0 0
        %237 = vmatprep.subr.bf16.mxu0 0
        %238 = vmatpush1.bf16.msra.mxu0 0
        %239 = vmatprep.subr.bf16.mxu0 0
        %240 = vmatpush1.bf16.msra.mxu0 0
        %241 = vmatprep.subr.bf16.mxu0 0
        %242 = vmatpush1.bf16.msra.mxu0 0
        %243 = vmatprep.subr.bf16.mxu0 0
        %244 = vmatpush1.bf16.msra.mxu0 0
        %245 = vmatprep.subr.bf16.mxu0 0
        %246 = vmatpush1.bf16.msra.mxu0 0
        %247 = vmatprep.subr.bf16.mxu0 0
        %248 = vmatpush1.bf16.msra.mxu0 0
        %249 = vmatprep.subr.bf16.mxu0 0
        %250 = vmatpush1.bf16.msra.mxu0 0
        %251 = vmatprep.subr.bf16.mxu0 0
        %252 = vmatpush1.bf16.msra.mxu0 0
        %253 = vmatprep.mubr.bf16.mxu0 0
        %254 = vmatmul.mubr.bf16.gmra.mrb[0].mxu0 %v219
        %v255 = vpop.f32.mrb[0].mxu0
        %v256 = vadd.f32 0.0, %v255
        %v257 = vpop.f32.mrb[0].mxu0
        %v258 = vadd.f32 0.0, %v257
        %v259 = vpop.f32.mrb[0].mxu0
        %v260 = vpop.f32.mrb[0].mxu0
        %261 = vdwg.mxu0
        %262 = vmatprep.subr.bf16.mxu0 0
        %263 = vmatpush1.bf16.msra.mxu0 %v207
        %264 = vmatprep.subr.bf16.mxu0 0
        %265 = vmatpush1.bf16.msra.mxu0 %v210
        %266 = vmatprep.subr.bf16.mxu0 0
        %267 = vmatpush1.bf16.msra.mxu0 0
        %268 = vmatprep.subr.bf16.mxu0 0
        %269 = vmatpush1.bf16.msra.mxu0 0
        %270 = vmatprep.subr.bf16.mxu0 0
        %271 = vmatpush1.bf16.msra.mxu0 0
        %272 = vmatprep.subr.bf16.mxu0 0
        %273 = vmatpush1.bf16.msra.mxu0 0
        %274 = vmatprep.subr.bf16.mxu0 0
        %275 = vmatpush1.bf16.msra.mxu0 0
        %276 = vmatprep.subr.bf16.mxu0 0
        %277 = vmatpush1.bf16.msra.mxu0 0
        %278 = vmatprep.subr.bf16.mxu0 0
        %279 = vmatpush1.bf16.msra.mxu0 0
        %280 = vmatprep.subr.bf16.mxu0 0
        %281 = vmatpush1.bf16.msra.mxu0 0
        %282 = vmatprep.subr.bf16.mxu0 0
        %283 = vmatpush1.bf16.msra.mxu0 0
        %284 = vmatprep.subr.bf16.mxu0 0
        %285 = vmatpush1.bf16.msra.mxu0 0
        %286 = vmatprep.subr.bf16.mxu0 0
        %287 = vmatpush1.bf16.msra.mxu0 0
        %288 = vmatprep.subr.bf16.mxu0 0
        %289 = vmatpush1.bf16.msra.mxu0 0
        %290 = vmatprep.subr.bf16.mxu0 0
        %291 = vmatpush1.bf16.msra.mxu0 0
        %292 = vmatprep.subr.bf16.mxu0 0
        %293 = vmatpush1.bf16.msra.mxu0 0
        %294 = vmatprep.mubr.bf16.mxu0 0
        %295 = vmatmul.mubr.bf16.gmra.mrb[0].mxu0 %v219
        %v296 = vpop.f32.mrb[0].mxu0
        %v297 = vadd.f32 0.0, %v296
        %v298 = vpop.f32.mrb[0].mxu0
        %v299 = vpop.f32.mrb[0].mxu0
        %v300 = vpop.f32.mrb[0].mxu0
        %301 = vdwg.mxu0
        %v302 = vmul.f32 %v256, 0.17677669
        %v303 = vpack.c.bf16 %v302, %v302
        %v304 = vpack.c.bf16 %v258, %v258
        %305 = vmatprep.subr.bf16.mxu0 0
        %306 = vmatpush1.bf16.xpose.msra.mxu0 %v304
        %307 = vmatprep.subr.bf16.mxu0 0
        %308 = vmatpush1.bf16.xpose.msra.mxu0 0
        %309 = vmatprep.subr.bf16.mxu0 0
        %310 = vmatpush1.bf16.xpose.msra.mxu0 0
        %311 = vmatprep.subr.bf16.mxu0 0
        %312 = vmatpush1.bf16.xpose.msra.mxu0 0
        %313 = vmatprep.subr.bf16.mxu0 0
        %314 = vmatpush1.bf16.xpose.msra.mxu0 0
        %315 = vmatprep.subr.bf16.mxu0 0
        %316 = vmatpush1.bf16.xpose.msra.mxu0 0
        %317 = vmatprep.subr.bf16.mxu0 0
        %318 = vmatpush1.bf16.xpose.msra.mxu0 0
        %319 = vmatprep.subr.bf16.mxu0 0
        %320 = vmatpush1.bf16.xpose.msra.mxu0 0
        %321 = vmatprep.subr.bf16.mxu0 0
        %322 = vmatpush1.bf16.xpose.msra.mxu0 0
        %323 = vmatprep.subr.bf16.mxu0 0
        %324 = vmatpush1.bf16.xpose.msra.mxu0 0
        %325 = vmatprep.subr.bf16.mxu0 0
        %326 = vmatpush1.bf16.xpose.msra.mxu0 0
        %327 = vmatprep.subr.bf16.mxu0 0
        %328 = vmatpush1.bf16.xpose.msra.mxu0 0
        %329 = vmatprep.subr.bf16.mxu0 0
        %330 = vmatpush1.bf16.xpose.msra.mxu0 0
        %331 = vmatprep.subr.bf16.mxu0 0
        %332 = vmatpush1.bf16.xpose.msra.mxu0 0
        %333 = vmatprep.subr.bf16.mxu0 0
        %334 = vmatpush1.bf16.xpose.msra.mxu0 0
        %335 = vmatprep.subr.bf16.mxu0 0
        %336 = vmatpush1.bf16.xpose.msra.mxu0 0
        %337 = vmatprep.mubr.bf16.mxu0 0
        %338 = vmatmul.mubr.bf16.gmra.mrb[0].mxu0 %v303
        %v339 = vpop.f32.mrb[0].mxu0
        %v340 = vadd.f32 0.0, %v339
        %v341 = vpop.f32.mrb[0].mxu0
        %v342 = vpop.f32.mrb[0].mxu0
        %v343 = vpop.f32.mrb[0].mxu0
        %344 = vdwg.mxu0
        %v345 = vlaneseq
        %v346 = vshrl.u32 %v345, 7
        %v347 = vlaneseq
        %v348 = vand.u32 %v347, 127
        %vm349 = vcmp.gt.s32.totalorder %v348, %v346
        %v350 = vsel %vm349, -inf, %v340
        %vm351 = vcmask 64512
        %v352 = vsel %vm351, %v350, -inf
        %353 = vmax.xlane.f32.xlu0 %v352
        %v354 = vpop.xlane.xlu0 %353
        %v355 = vsub.f32 %v350, %v354
        %v356 = vmul.f32 %v355, 1.442695
        %v357 = vpow.pop %v356
        %v358 = vsel %vm351, %v357, 0.0
        %359 = vadd.xlane.f32.xlu0 %v358
        %v360 = vpop.xlane.xlu0 %359
        %v361 = vrcp.pop %v360
        %v362 = vmul.f32 %v357, %v361
        %v363 = vpack.c.bf16 %v362, %v362
        %v364 = vpack.c.bf16 %v297, %v297
        %v366 = vsel %vm351, %v363, 0
        %vm368 = vcmask 1043456
        %v370 = vsel %vm368, %v364, 0
        %372 = vmatprep.subr.bf16.mxu0 0
        %373 = vmatpush1.bf16.msra.mxu0 %v370
        %374 = vmatprep.subr.bf16.mxu0 0
        %375 = vmatpush1.bf16.msra.mxu0 0
        %376 = vmatprep.subr.bf16.mxu0 0
        %377 = vmatpush1.bf16.msra.mxu0 0
        %378 = vmatprep.subr.bf16.mxu0 0
        %379 = vmatpush1.bf16.msra.mxu0 0
        %380 = vmatprep.subr.bf16.mxu0 0
        %381 = vmatpush1.bf16.msra.mxu0 0
        %382 = vmatprep.subr.bf16.mxu0 0
        %383 = vmatpush1.bf16.msra.mxu0 0
        %384 = vmatprep.subr.bf16.mxu0 0
        %385 = vmatpush1.bf16.msra.mxu0 0
        %386 = vmatprep.subr.bf16.mxu0 0
        %387 = vmatpush1.bf16.msra.mxu0 0
        %388 = vmatprep.subr.bf16.mxu0 0
        %389 = vmatpush1.bf16.msra.mxu0 0
        %390 = vmatprep.subr.bf16.mxu0 0
        %391 = vmatpush1.bf16.msra.mxu0 0
        %392 = vmatprep.subr.bf16.mxu0 0
        %393 = vmatpush1.bf16.msra.mxu0 0
        %394 = vmatprep.subr.bf16.mxu0 0
        %395 = vmatpush1.bf16.msra.mxu0 0
        %396 = vmatprep.subr.bf16.mxu0 0
        %397 = vmatpush1.bf16.msra.mxu0 0
        %398 = vmatprep.subr.bf16.mxu0 0
        %399 = vmatpush1.bf16.msra.mxu0 0
        %400 = vmatprep.subr.bf16.mxu0 0
        %401 = vmatpush1.bf16.msra.mxu0 0
        %402 = vmatprep.subr.bf16.mxu0 0
        %403 = vmatpush1.bf16.msra.mxu0 0
        %404 = vmatprep.mubr.bf16.mxu0 0
        %405 = vmatmul.mubr.bf16.gmra.mrb[0].mxu0 %v366
        %v406 = vpop.f32.mrb[0].mxu0
        %v407 = vadd.f32 0.0, %v406
        %v408 = vpop.f32.mrb[0].mxu0
        %v409 = vpop.f32.mrb[0].mxu0
        %v410 = vpop.f32.mrb[0].mxu0
        %411 = vdwg.mxu0
        %412 = vst [vmem:[%s173] sm:$0xff] %v407
        %s413 = sand.u32 %s75, 1
        %s414 = scalar_lea.sflag [#allocation4], %s413
        %s415 = sand.u32 %s75, 1
        %s416 = smul.addr %s415, 8
        %s417 = scalar_lea.vmem [#allocation7], %s416
        // Predicated region
        $region37: #{tpu_custom_call.1} parent=27 // pred_check
          %p418 = pneg %p85
        $region38: #{tpu_custom_call.1} parent=27 // pred_check_branch
          %420 = sbr.rel (%p418) target = $region40
        $region39: #{tpu_custom_call.1} parent=27 // pred_region
          %s422 = ssub.s32 128, 128
          %423 = vsyncadd %s414, %s422
          %s424 = smul.addr %s20, 128
          %s425 = scalar_lea.hbm %s2, %s424
          %s427 = sshll.u32 %s417, 4
          %s428 = int_to_ptr.vmem [resolvable:$true] %s427
          %430 = dma.vmem_to_hbm [thread:$0]  %s428, 128, %s425, %s414
        $region40: #{tpu_custom_call.1} parent=27 // pred_fallthru
          _
      $region28: #{tpu_custom_call.1} parent=5 // pred_fallthru
        _
      %p431 = scmp.le.s32.totalorder 2, %s15
      // Predicated region
      $region41: #{tpu_custom_call.1} parent=5 // pred_check
        %p432 = pneg %p431
      $region42: #{tpu_custom_call.1} parent=5 // pred_check_branch
        %434 = sbr.rel (%p432) target = $region44
      $region43: #{tpu_custom_call.1} parent=5 // pred_region
        %s435 = ssub.s32 %s15, 2
        // Predicated region
        $region45: #{tpu_custom_call.1} parent=43 // pred_check
          %p436 = pneg %p91
        $region46: #{tpu_custom_call.1} parent=43 // pred_check_branch
          %438 = sbr.rel (%p436) target = $region48
        $region47: #{tpu_custom_call.1} parent=43 // pred_region
          %s439 = sand.u32 %s76, 1
          %s440 = scalar_lea.sflag [#allocation4], %s439
          %s441 = sand.u32 %s76, 1
          %s442 = smul.addr %s441, 8
          %s443 = scalar_lea.vmem [#allocation7], %s442
          %444 = dma.done %s440, 128
        $region48: #{tpu_custom_call.1} parent=43 // pred_fallthru
          _
      $region44: #{tpu_custom_call.1} parent=5 // pred_fallthru
        _
    $region6: #{tpu_custom_call.1} parent=1 // loop_footer
      %s19 = sadd.s32 1, %s15
    $region7: #{tpu_custom_call.1} parent=1 // loop_footer_branch
      %14 = sbr.rel target = $region3
    $region8: #{tpu_custom_call.1} parent=1 // loop_exit
      _
    %445 = vsyncpa [#allocation3], 1
    %s446 = scalar_lea.sflag [#allocation3], 1
    %447 = vsyncpa %s446, 1
    %448 = vsyncpa [#allocation6], 1
    %449 = vsyncpa [#allocation4], 1
    %s450 = scalar_lea.sflag [#allocation4], 1
    %451 = vsyncpa %s450, 1

</llo_original>
